<compile_context>
chip_gen: v6e
topology: v6e:2x2x1
jax: 0.10.0
libtpu: 0.0.40
codegen_flags: <defaults>
</compile_context>

<pallas_src>
import functools

import jax
import jax.numpy as jnp
from jax.experimental import pallas as pl
from jax.experimental.pallas import tpu as pltpu

LANES = 128


def _mse_partial_kernel(o_ref, t_ref, out_ref, *, steps, block_rows, n_rows,
                        acc_rows, full_blocks, ragged, guard_full):
    """One grid step: accumulate sum((o-t)^2) of one (block_rows, 128) input
    block into the resident (acc_rows, 128) f32 accumulator of partition c."""
    c = pl.program_id(0)
    i = pl.program_id(1)
    blk = c * steps + i  # global block index along the row axis

    @pl.when(i == 0)
    def _init():
        out_ref[...] = jnp.zeros_like(out_ref)

    def _accum(masked):
        d = o_ref[...].astype(jnp.float32) - t_ref[...].astype(jnp.float32)
        sq = d * d  # (block_rows, 128)
        if masked:
            # Mask the *squared* values so unspecified overhang data (even
            # NaN/Inf) cannot leak into the sum.
            row = (jax.lax.broadcasted_iota(jnp.int32, sq.shape, 0)
                   + blk * block_rows)
            sq = jnp.where(row < n_rows, sq, 0.0)
        # Leading-axis partial sums onto the resident accumulator: pure VPU
        # adds split into block_rows/acc_rows independent chains (ILP) that
        # hide under the input DMA. The single cross-lane/sublane reduce to a
        # scalar happens once, in the wrapper.
        out_ref[...] += sq.reshape(-1, acc_rows, LANES).sum(axis=0)

    if not guard_full:
        # Exact tiling: every block is full and in bounds -> no masks, no
        # guards, just the accumulate.
        _accum(masked=False)
    else:
        @pl.when(blk < full_blocks)
        def _full():
            _accum(masked=False)

        if ragged:
            # Masking only on the single partial (last real) block.
            @pl.when(blk == full_blocks)
            def _partial():
                _accum(masked=True)
        # Phantom blocks (blk > full_blocks, short partition) contribute
        # nothing: neither branch fires.


def _device_tuning():
    """(block_rows, vmem_limit_bytes, num_partials) per TPU generation."""
    try:
        kind = jax.devices()[0].device_kind.lower()
    except Exception:
        kind = ""
    mib = 1024 * 1024
    if "v7" in kind:
        # 64 MiB physical VMEM (32 MiB scoped default), 2 TensorCores:
        # 4 MiB blocks (16 MiB of input buffers), split the stream in two.
        return 8192, 48 * mib, 2
    if "v6" in kind:
        # 128 MiB physical VMEM, single TC, fast HBM -> 8 MiB blocks need an
        # explicit budget above the 32 MiB scoped default.
        return 16384, 72 * mib, 1
    if "v5" in kind:
        # v5e: 16 MiB scoped default; 4 MiB blocks need the limit raised.
        return 8192, 32 * mib, 1
    return 8192, 40 * mib, 1


def custom_loss(outputs, targets, *, block_rows=None, num_partials=None):
    """Pallas-TPU equivalent of CustomLoss()(outputs, targets) == F.mse_loss."""
    assert outputs.shape == targets.shape, "MSELoss requires matching shapes"
    n_elems = int(outputs.size)

    def _sum_sq(o, t):
        d = o.reshape(-1).astype(jnp.float32) - t.reshape(-1).astype(jnp.float32)
        return jnp.sum(d * d)

    dflt_rows, vmem_limit, dflt_p = _device_tuning()
    if block_rows is None:
        block_rows = dflt_rows
    if num_partials is None:
        num_partials = dflt_p

    o_flat = outputs.reshape(-1)
    t_flat = targets.reshape(-1)

    # Minimum sublane granularity of the input dtype ((8,128) f32, (16,128)
    # bf16, (32,128) int8/fp8) so small / narrow-dtype inputs never hit a
    # degenerate Mosaic layout.
    itemsize = min(jnp.dtype(outputs.dtype).itemsize,
                   jnp.dtype(targets.dtype).itemsize)
    sub_mult = max(8, 32 // max(1, itemsize))

    n_rows = n_elems // LANES
    rem = n_elems - n_rows * LANES

    if n_rows < sub_mult:
        # Too small for a lane-aligned streaming kernel; plain XLA is optimal.
        return _sum_sq(o_flat, t_flat) * jnp.float32(1.0 / n_elems)

    if rem == 0:
        # Fast path: reshape of the full array -> pure bitcast, no HBM copy.
        o_2d = o_flat.reshape(n_rows, LANES)
        t_2d = t_flat.reshape(n_rows, LANES)
        tail = None
    else:
        # TODO(synk): when n_elems % 128 != 0 this prefix slice may materialize
        # an HBM copy; a 1-D blocked layout would avoid it but needs an
        # in-kernel relayout that costs more than the copy it saves.
        o_2d = o_flat[:n_rows * LANES].reshape(n_rows, LANES)
        t_2d = t_flat[:n_rows * LANES].reshape(n_rows, LANES)
        tail = (o_flat[n_rows * LANES:], t_flat[n_rows * LANES:])

    eff_block_rows = max(sub_mult,
                         (min(block_rows, n_rows) // sub_mult) * sub_mult)
    acc_rows = next(a for a in (32, 16, 8) if eff_block_rows % a == 0)

    total_blocks = pl.cdiv(n_rows, eff_block_rows)
    full_blocks = n_rows // eff_block_rows
    ragged = total_blocks != full_blocks        # last block overhangs n_rows

    p = max(1, min(num_partials, total_blocks))  # partitions (grid axis 0)
    steps = pl.cdiv(total_blocks, p)             # blocks per partition
    phantom = p * steps > total_blocks           # short last partition?
    guard_full = ragged or phantom

    if phantom:
        # Short partitions repeat the last real block so the DMA stays in
        # bounds; its contribution is suppressed in-kernel (no branch fires).
        in_idx = lambda c, i: (jnp.minimum(c * steps + i, total_blocks - 1), 0)
    else:
        in_idx = lambda c, i: (c * steps + i, 0)

    kernel = functools.partial(
        _mse_partial_kernel, steps=steps, block_rows=eff_block_rows,
        n_rows=n_rows, acc_rows=acc_rows, full_blocks=full_blocks,
        ragged=ragged, guard_full=guard_full)

    bytes_in = (n_rows * LANES *
                (jnp.dtype(outputs.dtype).itemsize
                 + jnp.dtype(targets.dtype).itemsize))
    cost = pl.CostEstimate(flops=3 * n_rows * LANES, transcendentals=0,
                           bytes_accessed=bytes_in + p * acc_rows * LANES * 4)

    partials = pl.pallas_call(
        kernel,
        out_shape=jax.ShapeDtypeStruct((p * acc_rows, LANES), jnp.float32),
        grid_spec=pltpu.PrefetchScalarGridSpec(
            num_scalar_prefetch=0,
            grid=(p, steps),
            in_specs=[
                pl.BlockSpec((eff_block_rows, LANES), in_idx),
                pl.BlockSpec((eff_block_rows, LANES), in_idx),
            ],
            out_specs=pl.BlockSpec((acc_rows, LANES), lambda c, i: (c, 0)),
        ),
        compiler_params=pltpu.CompilerParams(
            # TODO(synk): on v7x verify axis 0 really lands on both
            # TensorCores (xprof); if not, switch it to pltpu.CORE_PARALLEL.
            dimension_semantics=("parallel", "arbitrary"),
            vmem_limit_bytes=vmem_limit,
        ),
        cost_estimate=cost,
    )(o_2d, t_2d)

    total = jnp.sum(partials, dtype=jnp.float32)
    if tail is not None:
        total = total + _sum_sq(*tail)
    return total * jnp.float32(1.0 / n_elems)


if __name__ == "__main__":
    key = jax.random.PRNGKey(0)
    k1, k2, k3, k4, k5, k6 = jax.random.split(key, 6)

    # 1) Small NCHW-shaped inputs (B=2, C=4, H=W=16) -- single-block fast path.
    o1 = jax.random.normal(k1, (2, 4, 16, 16), dtype=jnp.float32)
    t1 = jax.random.normal(k2, (2, 4, 16, 16), dtype=jnp.float32)
    loss1 = custom_loss(o1, t1)
    jax.block_until_ready(loss1)
    ref1 = jnp.mean((o1 - t1) ** 2)
    assert jnp.allclose(loss1, ref1, rtol=1e-5, atol=1e-6), (loss1, ref1)

    # 2) Multi-step grid with a ragged last block; also exercise the 2-way
    #    partition path (phantom block + index clamp) with explicit overrides.
    o2 = jax.random.normal(k3, (2, 8, 33, 128), dtype=jnp.float32)
    t2 = jax.random.normal(k4, (2, 8, 33, 128), dtype=jnp.float32)
    ref2 = jnp.mean((o2 - t2) ** 2)
    loss2a = custom_loss(o2, t2, block_rows=64, num_partials=1)
    loss2b = custom_loss(o2, t2, block_rows=64, num_partials=2)
    jax.block_until_ready((loss2a, loss2b))
    assert jnp.allclose(loss2a, ref2, rtol=1e-5, atol=1e-6), (loss2a, ref2)
    assert jnp.allclose(loss2b, ref2, rtol=1e-5, atol=1e-6), (loss2b, ref2)

    # 3) Non-128-divisible element count -> kernel bulk + JAX sub-128 tail.
    o3 = jax.random.normal(k5, (5, 7, 41), dtype=jnp.float32)
    t3 = jax.random.normal(k6, (5, 7, 41), dtype=jnp.float32)
    loss3 = custom_loss(o3, t3)
    jax.block_until_ready(loss3)
    ref3 = jnp.mean((o3 - t3) ** 2)
    assert jnp.allclose(loss3, ref3, rtol=1e-5, atol=1e-6), (loss3, ref3)

    print("KERNEL_OK")
</pallas_src>

<mosaic_0001>
module attributes {stable_mosaic.version = 11 : i64} {
  func.func @_mse_partial_kernel(%arg0: i32, %arg1: i32, %arg2: memref<16x128xf32, #tpu.memory_space<vmem>>, %arg3: memref<16x128xf32, #tpu.memory_space<vmem>>, %arg4: memref<16x128xf32, #tpu.memory_space<vmem>>) attributes {dimension_semantics = [#tpu.dimension_semantics<parallel>, #tpu.dimension_semantics<arbitrary>], iteration_bounds = array<i64: 1, 1>, scalar_prefetch = 0 : i64, scratch_operands = 0 : i64, tpu.core_type = #tpu.core_type<tc>, window_params = [{transform_indices = @transform_0, window_bounds = array<i64: 16, 128>}, {transform_indices = @transform_1, window_bounds = array<i64: 16, 128>}, {transform_indices = @transform_2, window_bounds = array<i64: 16, 128>}]} {
    %c0_i32 = arith.constant 0 : i32
    %0 = arith.cmpi eq, %arg1, %c0_i32 : i32
    %1 = arith.extui %0 : i1 to i32
    %c0_i32_0 = arith.constant 0 : i32
    %2 = arith.cmpi ne, %1, %c0_i32_0 : i32
    scf.if %2 {
      %cst_8 = arith.constant 0.000000e+00 : f32
      %12 = vector.broadcast %cst_8 : f32 to vector<16x128xf32>
      %c0_9 = arith.constant 0 : index
      %c0_10 = arith.constant 0 : index
      %13 = vector.load %arg4[%c0_9, %c0_10] : memref<16x128xf32, #tpu.memory_space<vmem>>, vector<16x128xf32>
      tpu.vector_store %arg4[%c0_9, %c0_10], %12 {strides = array<i32>} : memref<16x128xf32, #tpu.memory_space<vmem>>, vector<16x128xf32>,
    } else {
    }
    %c0 = arith.constant 0 : index
    %c0_1 = arith.constant 0 : index
    %3 = vector.load %arg2[%c0, %c0_1] : memref<16x128xf32, #tpu.memory_space<vmem>>, vector<16x128xf32>
    %c0_2 = arith.constant 0 : index
    %c0_3 = arith.constant 0 : index
    %4 = vector.load %arg3[%c0_2, %c0_3] : memref<16x128xf32, #tpu.memory_space<vmem>>, vector<16x128xf32>
    %5 = arith.subf %3, %4 : vector<16x128xf32>
    %6 = arith.mulf %5, %5 : vector<16x128xf32>
    %c0_4 = arith.constant 0 : index
    %c0_5 = arith.constant 0 : index
    %7 = vector.load %arg4[%c0_4, %c0_5] : memref<16x128xf32, #tpu.memory_space<vmem>>, vector<16x128xf32>
    %8 = vector.shape_cast %6 : vector<16x128xf32> to vector<1x16x128xf32>
    %cst = arith.constant dense<0.000000e+00> : vector<16x128xf32>
    %9 = vector.multi_reduction <add>, %8, %cst [0] : vector<1x16x128xf32> to vector<16x128xf32>
    %10 = arith.addf %7, %9 : vector<16x128xf32>
    %c0_6 = arith.constant 0 : index
    %c0_7 = arith.constant 0 : index
    %11 = vector.load %arg4[%c0_6, %c0_7] : memref<16x128xf32, #tpu.memory_space<vmem>>, vector<16x128xf32>
    tpu.vector_store %arg4[%c0_6, %c0_7], %10 {strides = array<i32>} : memref<16x128xf32, #tpu.memory_space<vmem>>, vector<16x128xf32>,
    return
  }
  func.func @transform_0(%arg0: i32, %arg1: i32) -> (i32, i32) {
    %c1_i32 = arith.constant 1 : i32
    %0 = arith.muli %arg0, %c1_i32 : i32
    %1 = arith.addi %0, %arg1 : i32
    %c0_i32 = arith.constant 0 : i32
    %c0_i32_0 = arith.constant 0 : i32
    return %1, %c0_i32 : i32, i32
  }
  func.func @transform_1(%arg0: i32, %arg1: i32) -> (i32, i32) {
    %c1_i32 = arith.constant 1 : i32
    %0 = arith.muli %arg0, %c1_i32 : i32
    %1 = arith.addi %0, %arg1 : i32
    %c0_i32 = arith.constant 0 : i32
    %c0_i32_0 = arith.constant 0 : i32
    return %1, %c0_i32 : i32, i32
  }
  func.func @transform_2(%arg0: i32, %arg1: i32) -> (i32, i32) {
    %c0_i32 = arith.constant 0 : i32
    %c0_i32_0 = arith.constant 0 : i32
    return %arg0, %c0_i32 : i32, i32
  }
}

</mosaic_0001>

<llo_original>
// kernel: tpu_custom_call.1
$region0: #{tpu_custom_call.1}
  #allocation0 [shape = 'u32[]', space=smem, size = 0x4, offset = 0x4, fixed_abs, tag = 'smem constant byte address 0x4 - core index']
  #allocation1 [shape = 'u32[144,128]{1,0:T(1,128)}', space=vmem, size = 0x12000, scoped, tag = 'internal scratch']
  %s0 = inlined_call_operand.hbm [shape: f32[16,128], index: 0, kind: input, shape index: {}]
  %s1 = inlined_call_operand.hbm [shape: f32[16,128], index: 1, kind: input, shape index: {}]
  %s2 = inlined_call_operand.hbm [shape: f32[16,128], index: 2, kind: output, shape index: {}]
  %s3 = sld [smem:[#allocation0]]
  $region30: #{tpu_custom_call.1} parent=0
    _
  %s5 = ssub.s32 1, %s3
  %s6 = scalar_select 0, %s5, %s3
  $region1: #{tpu_custom_call.1} parent=0
    #allocation2 [shape = 'u8[8192]{0}', space=vmem, size = 0x2000, scoped, tag = 'input window, operand 0, single buffered']
    #allocation3 [shape = 's32[1]{0}', space=sflag, size = 0x4, scoped, tag = 'scoped memory for tpu_custom_call.1']
    #allocation4 [shape = 's32[1]{0}', space=sflag, size = 0x4, scoped, tag = 'scoped memory for tpu_custom_call.1']
    #allocation5 [shape = 'u8[8192]{0}', space=vmem, size = 0x2000, scoped, tag = 'input window, operand 1, single buffered']
    #allocation6 [shape = 's32[1]{0}', space=sflag, size = 0x4, scoped, tag = 'scoped memory for tpu_custom_call.1']
    #allocation7 [shape = 'u8[8192]{0}', space=vmem, size = 0x2000, scoped, tag = 'output window, operand 0, single buffered']
    %7 = vsyncpa [#allocation3], 0
    %8 = vsyncpa [#allocation6], 0
    %9 = vsyncpa [#allocation4], 0
    // Predicated region
    $region2: #{tpu_custom_call.1} parent=1 // pred_check
      _
    $region3: #{tpu_custom_call.1} parent=1 // pred_check_branch
      %11 = sbr.rel (0) target = $region5
    $region4: #{tpu_custom_call.1} parent=1 // pred_region
      %s12 = sadd.s32 0, 0
      %s13 = smul.u32 2, %s12
      %s15 = ssub.s32 256, 256
      %16 = vsyncadd [#allocation3], %s15
      %s17 = smul.addr %s13, 128
      %s18 = scalar_lea.hbm %s0, %s17
      %s19 = sshll.u32 [#allocation2], 4
      %s20 = int_to_ptr.vmem [resolvable:$true] %s19
      %25 = dma.hbm_to_vmem [thread:$0]  %s18, 256, %s20, [#allocation3], 128, 128, 8
    $region5: #{tpu_custom_call.1} parent=1 // pred_fallthru
      _
    // Predicated region
    $region6: #{tpu_custom_call.1} parent=1 // pred_check
      _
    $region7: #{tpu_custom_call.1} parent=1 // pred_check_branch
      %27 = sbr.rel (0) target = $region9
    $region8: #{tpu_custom_call.1} parent=1 // pred_region
      %s28 = sadd.s32 0, 0
      %s29 = smul.u32 2, %s28
      %s31 = ssub.s32 256, 256
      %32 = vsyncadd [#allocation6], %s31
      %s33 = smul.addr %s29, 128
      %s34 = scalar_lea.hbm %s1, %s33
      %s35 = sshll.u32 [#allocation5], 4
      %s36 = int_to_ptr.vmem [resolvable:$true] %s35
      %41 = dma.hbm_to_vmem [thread:$0]  %s34, 256, %s36, [#allocation6], 128, 128, 8
    $region9: #{tpu_custom_call.1} parent=1 // pred_fallthru
      _
    // Predicated region
    $region10: #{tpu_custom_call.1} parent=1 // pred_check
      _
    $region11: #{tpu_custom_call.1} parent=1 // pred_check_branch
      %43 = sbr.rel (0) target = $region13
    $region12: #{tpu_custom_call.1} parent=1 // pred_region
      %44 = dma.done [#allocation3], 256
    $region13: #{tpu_custom_call.1} parent=1 // pred_fallthru
      _
    // Predicated region
    $region14: #{tpu_custom_call.1} parent=1 // pred_check
      _
    $region15: #{tpu_custom_call.1} parent=1 // pred_check_branch
      %46 = sbr.rel (0) target = $region17
    $region16: #{tpu_custom_call.1} parent=1 // pred_region
      %47 = dma.done [#allocation6], 256
    $region17: #{tpu_custom_call.1} parent=1 // pred_fallthru
      _
    %s48 = sadd.s32 0, 0
    %s49 = smul.u32 2, %s48
    %s50 = sadd.s32 0, 0
    %s51 = smul.u32 2, %s50
    %p52 = scmp.eq.s32.totalorder 0, 0
    // Predicated region
    $region18: #{tpu_custom_call.1} parent=1 // pred_check
      %p53 = pneg %p52
    $region19: #{tpu_custom_call.1} parent=1 // pred_check_branch
      %55 = sbr.rel (%p53) target = $region21
    $region20: #{tpu_custom_call.1} parent=1 // pred_region
      %56 = vst [vmem:[#allocation7] sm:$0xff] 0.0
      %57 = vst [vmem:[#allocation7 + $0x8] sm:$0xff] 0.0
    $region21: #{tpu_custom_call.1} parent=1 // pred_fallthru
      _
    %v58 = vld [vmem:[#allocation2] sm:$0xff]
    %v59 = vld [vmem:[#allocation2 + $0x8] sm:$0xff]
    %v60 = vld [vmem:[#allocation5] sm:$0xff]
    %v61 = vld [vmem:[#allocation5 + $0x8] sm:$0xff]
    %v62 = vsub.f32 %v58, %v60
    %v63 = vsub.f32 %v59, %v61
    %v64 = vmul.f32 %v62, %v62
    %v65 = vmul.f32 %v63, %v63
    %v66 = vld [vmem:[#allocation7] sm:$0xff]
    %v67 = vld [vmem:[#allocation7 + $0x8] sm:$0xff]
    %v68 = vadd.f32 %v64, 0.0
    %v69 = vadd.f32 %v65, 0.0
    %v70 = vadd.f32 %v66, %v68
    %v71 = vadd.f32 %v67, %v69
    %72 = vst [vmem:[#allocation7] sm:$0xff] %v70
    %73 = vst [vmem:[#allocation7 + $0x8] sm:$0xff] %v71
    // Predicated region
    $region22: #{tpu_custom_call.1} parent=1 // pred_check
      _
    $region23: #{tpu_custom_call.1} parent=1 // pred_check_branch
      %75 = sbr.rel (0) target = $region25
    $region24: #{tpu_custom_call.1} parent=1 // pred_region
      %s77 = ssub.s32 256, 256
      %78 = vsyncadd [#allocation4], %s77
      %s79 = sshll.u32 [#allocation7], 4
      %s80 = int_to_ptr.vmem [resolvable:$true] %s79
      %85 = dma.vmem_to_hbm [thread:$0]  %s80, 256, %s2, [#allocation4], 128, 128, 8
    $region25: #{tpu_custom_call.1} parent=1 // pred_fallthru
      _
    // Predicated region
    $region26: #{tpu_custom_call.1} parent=1 // pred_check
      _
    $region27: #{tpu_custom_call.1} parent=1 // pred_check_branch
      %87 = sbr.rel (0) target = $region29
    $region28: #{tpu_custom_call.1} parent=1 // pred_region
      %88 = dma.done [#allocation4], 256
    $region29: #{tpu_custom_call.1} parent=1 // pred_fallthru
      _
    %89 = vsyncpa [#allocation3], 1
    %90 = vsyncpa [#allocation6], 1
    %91 = vsyncpa [#allocation4], 1

</llo_original>
